<compile_context>
chip_gen: v7x
topology: tpu7x:2x2x1
jax: 0.10.0
libtpu: 0.0.40
codegen_flags: <defaults>
</compile_context>

<pallas_src>
import math

import numpy as np
import jax
import jax.numpy as jnp
from jax.experimental import pallas as pl
from jax.experimental.pallas import tpu as pltpu

# ---- module hyper-parameters (torchaudio MelSpectrogram / MFCC defaults) ----
SAMPLE_RATE = 16000
N_MFCC = 40
N_FFT = 400
WIN_LENGTH = N_FFT
HOP_LENGTH = WIN_LENGTH // 2          # 200 (N_FFT == 2*HOP is relied on for framing)
N_MELS = 128
N_FREQS = N_FFT // 2 + 1              # 201 (onesided rfft)
N_FREQS_PAD = 256                     # lane-pad rfft bins -> matmul N dims are 128-multiples
N_MFCC_PAD = 128                      # lane-dense DCT output, sliced to 40 in the wrapper
TOP_DB = 80.0
AMIN = 1e-10                          # AmplitudeToDB amin; ref=1.0 -> db_multiplier=0
TM_MAX = 512                          # max row tile; fits scoped VMEM on v5e/v6e/v7x


def _round_up(x, m):
    return ((x + m - 1) // m) * m


def _cdiv(a, b):
    return -(-a // b)


# ------------------- deterministic parameter setup (host numpy) -------------------
def _build_windowed_dft_np():
    """(N_FFT, 2*N_FREQS_PAD) matrix [win*cos | -win*sin], zero-padded lane columns."""
    n = np.arange(N_FFT, dtype=np.float64)
    win = 0.5 - 0.5 * np.cos(2.0 * math.pi * n / N_FFT)        # periodic hann
    k = np.arange(N_FREQS, dtype=np.float64)
    ang = 2.0 * math.pi * np.outer(n, k) / N_FFT
    cos_m = np.cos(ang) * win[:, None]                          # window folded in
    sin_m = -np.sin(ang) * win[:, None]
    pad = N_FREQS_PAD - N_FREQS
    cos_p = np.pad(cos_m, ((0, 0), (0, pad)))
    sin_p = np.pad(sin_m, ((0, 0), (0, pad)))
    return np.concatenate([cos_p, sin_p], axis=1).astype(np.float32)   # (400, 512)


def _mel_fbanks_np():
    """HTK mel filterbank (torchaudio default: mel_scale='htk', norm=None), lane-padded."""
    def hz2mel(f):
        return 2595.0 * np.log10(1.0 + f / 700.0)

    def mel2hz(m):
        return 700.0 * (10.0 ** (m / 2595.0) - 1.0)

    all_freqs = np.linspace(0.0, SAMPLE_RATE / 2.0, N_FREQS)
    m_pts = np.linspace(hz2mel(0.0), hz2mel(SAMPLE_RATE / 2.0), N_MELS + 2)
    f_pts = mel2hz(m_pts)
    f_diff = f_pts[1:] - f_pts[:-1]
    slopes = f_pts[None, :] - all_freqs[:, None]                # (n_freqs, n_mels+2)
    down = -slopes[:, :-2] / f_diff[:-1]
    up = slopes[:, 2:] / f_diff[1:]
    fb = np.maximum(0.0, np.minimum(down, up))                  # (n_freqs, n_mels)
    fb = np.pad(fb, ((0, N_FREQS_PAD - N_FREQS), (0, 0)))       # (256, 128)
    return fb.astype(np.float32)


def _create_dct_np():
    """F.create_dct(n_mfcc, n_mels, norm='ortho'), lane-padded to (128, 128)."""
    n = np.arange(N_MELS, dtype=np.float64)
    k = np.arange(N_MFCC, dtype=np.float64)
    dct = np.cos(math.pi / N_MELS * np.outer(n + 0.5, k))       # (n_mels, n_mfcc)
    dct[:, 0] *= 1.0 / math.sqrt(2.0)
    dct *= math.sqrt(2.0 / N_MELS)
    dct = np.pad(dct, ((0, 0), (0, N_MFCC_PAD - N_MFCC)))       # (128, 128)
    return dct.astype(np.float32)


_W_DFT_NP = _build_windowed_dft_np()   # (400, 512)
_FB_NP = _mel_fbanks_np()              # (256, 128)
_DCT_NP = _create_dct_np()             # (128, 128)


# ------------------------------- Pallas kernels -------------------------------
def _mel_db_kernel(frames_ref, w_ref, fb_ref, meldb_ref, tmax_ref):
    # frames_ref: (TM, 400); w_ref: (400, 512) = window-folded [cos | -sin]
    y = jnp.dot(frames_ref[...], w_ref[...], preferred_element_type=jnp.float32)  # (TM, 512)
    re = y[:, :N_FREQS_PAD]
    im = y[:, N_FREQS_PAD:]
    power = re * re + im * im                                   # |rfft|^2, power=2.0
    mel = jnp.dot(power, fb_ref[...], preferred_element_type=jnp.float32)          # (TM, 128)
    mel_db = 10.0 * jnp.log10(jnp.maximum(mel, AMIN))           # AmplitudeToDB (no clamp yet)
    meldb_ref[...] = mel_db
    # Per-tile max side output. Zero-padded rows are exactly 10*log10(amin) = -100 dB,
    # which never exceeds the true max, so including them is safe.
    col_max = jnp.max(mel_db, axis=0)                           # (128,)
    tmax_ref[...] = jnp.broadcast_to(col_max[None, None, :], (1, 8, N_MELS))


def _mel_db_pallas(frames, w_mat, fb, tm):
    n_rows = frames.shape[0]
    n_tiles = n_rows // tm
    return pl.pallas_call(
        _mel_db_kernel,
        out_shape=(
            jax.ShapeDtypeStruct((n_rows, N_MELS), jnp.float32),
            jax.ShapeDtypeStruct((n_tiles, 8, N_MELS), jnp.float32),
        ),
        grid=(n_tiles,),
        in_specs=[
            pl.BlockSpec((tm, N_FFT), lambda i: (i, 0)),
            pl.BlockSpec((N_FFT, 2 * N_FREQS_PAD), lambda i: (0, 0)),
            pl.BlockSpec((N_FREQS_PAD, N_MELS), lambda i: (0, 0)),
        ],
        out_specs=(
            pl.BlockSpec((tm, N_MELS), lambda i: (i, 0)),
            pl.BlockSpec((1, 8, N_MELS), lambda i: (i, 0, 0)),
        ),
        compiler_params=pltpu.CompilerParams(dimension_semantics=("parallel",)),
    )(frames, w_mat, fb)


def _dct_kernel(gmax_ref, meldb_ref, dct_ref, out_ref):
    # top_db clamp relative to the global max (torchaudio AmplitudeToDB semantics for
    # the batched (B, n_mels, T) mel spectrogram), then ortho DCT-II via matmul.
    floor = gmax_ref[0] - TOP_DB
    clamped = jnp.maximum(meldb_ref[...], floor)
    out_ref[...] = jnp.dot(clamped, dct_ref[...], preferred_element_type=jnp.float32)


def _dct_pallas(gmax, meldb, dct_mat, tm):
    n_rows = meldb.shape[0]
    return pl.pallas_call(
        _dct_kernel,
        out_shape=jax.ShapeDtypeStruct((n_rows, N_MFCC_PAD), jnp.float32),
        grid=(n_rows // tm,),
        in_specs=[
            pl.BlockSpec(memory_space=pltpu.MemorySpace.SMEM),   # scalar global max
            pl.BlockSpec((tm, N_MELS), lambda i: (i, 0)),
            pl.BlockSpec((N_MELS, N_MFCC_PAD), lambda i: (0, 0)),
        ],
        out_specs=pl.BlockSpec((tm, N_MFCC_PAD), lambda i: (i, 0)),
        compiler_params=pltpu.CompilerParams(dimension_semantics=("parallel",)),
    )(gmax, meldb, dct_mat)


# --------------------------------- glue (JAX) ---------------------------------
def _frame(wav):
    # torch.stft(center=True, pad_mode='reflect') framing; uses N_FFT == 2*HOP:
    # frame[t] = concat(chunk[t], chunk[t+1]) with non-overlapping HOP-sized chunks,
    # so no gather is needed (cheap slice + concat).
    pad = N_FFT // 2
    wav_p = jnp.pad(wav, ((0, 0), (pad, pad)), mode="reflect")
    n_frames = 1 + (wav_p.shape[-1] - N_FFT) // HOP_LENGTH
    chunks = wav_p[:, : (n_frames + 1) * HOP_LENGTH]
    chunks = chunks.reshape(wav.shape[0], n_frames + 1, HOP_LENGTH)
    frames = jnp.concatenate([chunks[:, :-1, :], chunks[:, 1:, :]], axis=-1)
    return frames                                               # (B, n_frames, N_FFT)


def _pick_tile(n_rows):
    """Balanced row tile: tiles <= TM_MAX rows, <= 7 zero-padded rows per tile."""
    n_tiles = max(1, _cdiv(n_rows, TM_MAX))
    tm = max(8, _round_up(_cdiv(n_rows, n_tiles), 8))
    return tm, n_tiles * tm


def mfcc_specaug_forward(waveform):
    """waveform: (..., time) float32 -> mfcc: (..., n_mfcc, n_frames)"""
    shape = waveform.shape
    wav = waveform.reshape(-1, shape[-1]).astype(jnp.float32)

    frames = _frame(wav)                                        # (B, T, N_FFT)
    B, n_frames, _ = frames.shape
    n_rows = B * n_frames

    tm, rows_pad = _pick_tile(n_rows)
    frames_flat = frames.reshape(n_rows, N_FFT)
    if rows_pad != n_rows:
        frames_flat = jnp.pad(frames_flat, ((0, rows_pad - n_rows), (0, 0)))

    w_mat = jnp.asarray(_W_DFT_NP)                              # (400, 512)
    fb = jnp.asarray(_FB_NP)                                    # (256, 128)
    dct_mat = jnp.asarray(_DCT_NP)                              # (128, 128)

    mel_db, tile_max = _mel_db_pallas(frames_flat, w_mat, fb, tm)
    gmax = jnp.max(tile_max).reshape(1).astype(jnp.float32)     # global max for top_db clamp
    mfcc_flat = _dct_pallas(gmax, mel_db, dct_mat, tm)          # (rows_pad, 128)

    mfcc = mfcc_flat[:n_rows, :N_MFCC].reshape(B, n_frames, N_MFCC)
    mfcc = jnp.transpose(mfcc, (0, 2, 1))                       # (B, n_mfcc, T)
    return mfcc.reshape(shape[:-1] + (N_MFCC, n_frames))


if __name__ == "__main__":
    key = jax.random.PRNGKey(0)
    waveform = jax.random.normal(key, (2, 2048), dtype=jnp.float32)

    forward = jax.jit(mfcc_specaug_forward)
    out = jax.block_until_ready(forward(waveform))

    # L=2048, hop=200, center=True -> 1 + 2048//200 = 11 frames
    assert out.shape == (2, N_MFCC, 11), out.shape
    assert out.dtype == jnp.float32
    assert bool(jnp.all(jnp.isfinite(out)))
    print("KERNEL_OK")
</pallas_src>

<mosaic_0001>
module attributes {stable_mosaic.version = 11 : i64} {
  func.func @_mel_db_kernel(%arg0: i32, %arg1: memref<24x400xf32, #tpu.memory_space<vmem>>, %arg2: memref<400x512xf32, #tpu.memory_space<vmem>>, %arg3: memref<256x128xf32, #tpu.memory_space<vmem>>, %arg4: memref<24x128xf32, #tpu.memory_space<vmem>>, %arg5: memref<1x8x128xf32, #tpu.memory_space<vmem>>) attributes {dimension_semantics = [#tpu.dimension_semantics<parallel>], iteration_bounds = array<i64: 1>, scalar_prefetch = 0 : i64, scratch_operands = 0 : i64, tpu.core_type = #tpu.core_type<tc>, window_params = [{transform_indices = @transform_0, window_bounds = array<i64: 24, 400>}, {pipeline_mode = #tpu.pipeline_mode<synchronous>, transform_indices = @transform_1, window_bounds = array<i64: 400, 512>}, {pipeline_mode = #tpu.pipeline_mode<synchronous>, transform_indices = @transform_2, window_bounds = array<i64: 256, 128>}, {transform_indices = @transform_3, window_bounds = array<i64: 24, 128>}, {transform_indices = @transform_4, window_bounds = array<i64: 1, 8, 128>}]} {
    %c0 = arith.constant 0 : index
    %c0_0 = arith.constant 0 : index
    %0 = vector.load %arg1[%c0, %c0_0] : memref<24x400xf32, #tpu.memory_space<vmem>>, vector<24x400xf32>
    %c0_1 = arith.constant 0 : index
    %c0_2 = arith.constant 0 : index
    %1 = vector.load %arg2[%c0_1, %c0_2] : memref<400x512xf32, #tpu.memory_space<vmem>>, vector<400x512xf32>
    %cst = arith.constant dense<0.000000e+00> : vector<24x512xf32>
    %2 = tpu.matmul %0, %1, %cst {dimension_numbers = #tpu.dot_dimension_numbers<[1], [0], [0], [1], [0, 0, 1, 1], [], []>} : vector<24x400xf32>, vector<400x512xf32>, vector<24x512xf32> -> vector<24x512xf32>
    %3 = vector.extract_strided_slice %2 {offsets = [0, 0], sizes = [24, 256], strides = [1, 1]} : vector<24x512xf32> to vector<24x256xf32>
    %4 = vector.extract_strided_slice %2 {offsets = [0, 256], sizes = [24, 256], strides = [1, 1]} : vector<24x512xf32> to vector<24x256xf32>
    %5 = arith.mulf %3, %3 : vector<24x256xf32>
    %6 = arith.mulf %4, %4 : vector<24x256xf32>
    %7 = arith.addf %5, %6 : vector<24x256xf32>
    %c0_3 = arith.constant 0 : index
    %c0_4 = arith.constant 0 : index
    %8 = vector.load %arg3[%c0_3, %c0_4] : memref<256x128xf32, #tpu.memory_space<vmem>>, vector<256x128xf32>
    %cst_5 = arith.constant dense<0.000000e+00> : vector<24x128xf32>
    %9 = tpu.matmul %7, %8, %cst_5 {dimension_numbers = #tpu.dot_dimension_numbers<[1], [0], [0], [1], [0, 0, 1, 1], [], []>} : vector<24x256xf32>, vector<256x128xf32>, vector<24x128xf32> -> vector<24x128xf32>
    %cst_6 = arith.constant 1.000000e-10 : f32
    %10 = vector.broadcast %cst_6 : f32 to vector<24x128xf32>
    %11 = arith.maximumf %9, %10 : vector<24x128xf32>
    %12 = math.log %11 : vector<24x128xf32>
    %cst_7 = arith.constant 0.434294492 : f32
    %13 = vector.broadcast %cst_7 : f32 to vector<24x128xf32>
    %14 = arith.mulf %12, %13 : vector<24x128xf32>
    %cst_8 = arith.constant 1.000000e+01 : f32
    %15 = vector.broadcast %cst_8 : f32 to vector<24x128xf32>
    %16 = arith.mulf %15, %14 : vector<24x128xf32>
    %c0_9 = arith.constant 0 : index
    %c0_10 = arith.constant 0 : index
    %17 = vector.load %arg4[%c0_9, %c0_10] : memref<24x128xf32, #tpu.memory_space<vmem>>, vector<24x128xf32>
    tpu.vector_store %arg4[%c0_9, %c0_10], %16 {strides = array<i32>} : memref<24x128xf32, #tpu.memory_space<vmem>>, vector<24x128xf32>,
    %cst_11 = arith.constant dense<0xFF800000> : vector<128xf32>
    %18 = vector.multi_reduction <maximumf>, %16, %cst_11 [0] : vector<24x128xf32> to vector<128xf32>
    %19 = vector.shape_cast %18 : vector<128xf32> to vector<1x1x128xf32>
    %20 = vector.shape_cast %19 : vector<1x1x128xf32> to vector<1x1x128xf32>
    %21 = vector.broadcast %20 : vector<1x1x128xf32> to vector<1x8x128xf32>
    %c0_12 = arith.constant 0 : index
    %c0_13 = arith.constant 0 : index
    %c0_14 = arith.constant 0 : index
    %22 = vector.load %arg5[%c0_12, %c0_13, %c0_14] : memref<1x8x128xf32, #tpu.memory_space<vmem>>, vector<1x8x128xf32>
    tpu.vector_store %arg5[%c0_12, %c0_13, %c0_14], %21 {strides = array<i32>} : memref<1x8x128xf32, #tpu.memory_space<vmem>>, vector<1x8x128xf32>,
    return
  }
  func.func @transform_0(%arg0: i32) -> (i32, i32) {
    %c0_i32 = arith.constant 0 : i32
    %c0_i32_0 = arith.constant 0 : i32
    return %arg0, %c0_i32 : i32, i32
  }
  func.func @transform_1(%arg0: i32) -> (i32, i32) {
    %c0_i32 = arith.constant 0 : i32
    %c0_i32_0 = arith.constant 0 : i32
    %c0_i32_1 = arith.constant 0 : i32
    return %c0_i32, %c0_i32_0 : i32, i32
  }
  func.func @transform_2(%arg0: i32) -> (i32, i32) {
    %c0_i32 = arith.constant 0 : i32
    %c0_i32_0 = arith.constant 0 : i32
    %c0_i32_1 = arith.constant 0 : i32
    return %c0_i32, %c0_i32_0 : i32, i32
  }
  func.func @transform_3(%arg0: i32) -> (i32, i32) {
    %c0_i32 = arith.constant 0 : i32
    %c0_i32_0 = arith.constant 0 : i32
    return %arg0, %c0_i32 : i32, i32
  }
  func.func @transform_4(%arg0: i32) -> (i32, i32, i32) {
    %c0_i32 = arith.constant 0 : i32
    %c0_i32_0 = arith.constant 0 : i32
    %c0_i32_1 = arith.constant 0 : i32
    return %arg0, %c0_i32, %c0_i32_0 : i32, i32, i32
  }
}

module attributes {stable_mosaic.version = 11 : i64} {
  func.func @_dct_kernel(%arg0: i32, %arg1: memref<1xf32, #tpu.memory_space<smem>>, %arg2: memref<24x128xf32, #tpu.memory_space<vmem>>, %arg3: memref<128x128xf32, #tpu.memory_space<vmem>>, %arg4: memref<24x128xf32, #tpu.memory_space<vmem>>) attributes {dimension_semantics = [#tpu.dimension_semantics<parallel>], iteration_bounds = array<i64: 1>, scalar_prefetch = 0 : i64, scratch_operands = 0 : i64, tpu.core_type = #tpu.core_type<tc>, window_params = [{transform_indices = @transform_0, window_bounds = array<i64: 1>}, {transform_indices = @transform_1, window_bounds = array<i64: 24, 128>}, {pipeline_mode = #tpu.pipeline_mode<synchronous>, transform_indices = @transform_2, window_bounds = array<i64: 128, 128>}, {transform_indices = @transform_3, window_bounds = array<i64: 24, 128>}]} {
    %c0 = arith.constant 0 : index
    %0 = memref.load %arg1[%c0] : memref<1xf32, #tpu.memory_space<smem>>
    %cst = arith.constant 8.000000e+01 : f32
    %1 = arith.subf %0, %cst : f32
    %c0_0 = arith.constant 0 : index
    %c0_1 = arith.constant 0 : index
    %2 = vector.load %arg2[%c0_0, %c0_1] : memref<24x128xf32, #tpu.memory_space<vmem>>, vector<24x128xf32>
    %3 = vector.broadcast %1 : f32 to vector<24x128xf32>
    %4 = arith.maximumf %2, %3 : vector<24x128xf32>
    %c0_2 = arith.constant 0 : index
    %c0_3 = arith.constant 0 : index
    %5 = vector.load %arg3[%c0_2, %c0_3] : memref<128x128xf32, #tpu.memory_space<vmem>>, vector<128x128xf32>
    %cst_4 = arith.constant dense<0.000000e+00> : vector<24x128xf32>
    %6 = tpu.matmul %4, %5, %cst_4 {dimension_numbers = #tpu.dot_dimension_numbers<[1], [0], [0], [1], [0, 0, 1, 1], [], []>} : vector<24x128xf32>, vector<128x128xf32>, vector<24x128xf32> -> vector<24x128xf32>
    %c0_5 = arith.constant 0 : index
    %c0_6 = arith.constant 0 : index
    %7 = vector.load %arg4[%c0_5, %c0_6] : memref<24x128xf32, #tpu.memory_space<vmem>>, vector<24x128xf32>
    tpu.vector_store %arg4[%c0_5, %c0_6], %6 {strides = array<i32>} : memref<24x128xf32, #tpu.memory_space<vmem>>, vector<24x128xf32>,
    return
  }
  func.func @transform_0(%arg0: i32) -> i32 {
    %c0_i32 = arith.constant 0 : i32
    %c0_i32_0 = arith.constant 0 : i32
    return %c0_i32 : i32
  }
  func.func @transform_1(%arg0: i32) -> (i32, i32) {
    %c0_i32 = arith.constant 0 : i32
    %c0_i32_0 = arith.constant 0 : i32
    return %arg0, %c0_i32 : i32, i32
  }
  func.func @transform_2(%arg0: i32) -> (i32, i32) {
    %c0_i32 = arith.constant 0 : i32
    %c0_i32_0 = arith.constant 0 : i32
    %c0_i32_1 = arith.constant 0 : i32
    return %c0_i32, %c0_i32_0 : i32, i32
  }
  func.func @transform_3(%arg0: i32) -> (i32, i32) {
    %c0_i32 = arith.constant 0 : i32
    %c0_i32_0 = arith.constant 0 : i32
    return %arg0, %c0_i32 : i32, i32
  }
}

</mosaic_0001>

<llo_original>
// kernel: reverse.1
$region0: #{reverse.1}
  %s0 = inlined_call_operand.vmem [shape: f32[2,256], index: 0, kind: input, shape index: {}]
  %s1 = inlined_call_operand.vmem [shape: f32[2,256], index: 1, kind: output, shape index: {}]
  %v2 = vlaneseq
  %v3 = vsub.s32 127, %v2
  %4 = vset.pattern.permute.xlu0 %v3
  $region1: #{reverse.1} parent=0
    #allocation0 [shape = 'u8[4096]{0}', space=vmem, size = 0x1000, scoped, tag = 'operand span for operand 0']
    #allocation1 [shape = 'u8[2048]{0}', space=vmem, size = 0x800, scoped, tag = 'packed  for operand 0']
    #allocation2 [shape = 'u8[4096]{0}', space=vmem, size = 0x1000, scoped, tag = 'operand span for operand 1']
    #allocation3 [shape = 'u8[2048]{0}', space=vmem, size = 0x800, scoped, tag = 'packed  for operand 1']
    loop: start=0, step=1, limit=4
    $region2: #{reverse.1} parent=1 // loop_pre_header
      _
    $region3: #{reverse.1} parent=1 // loop_header
      %s6 = sphi 0, %s10
      %p7 = scmp.ge.s32.totalorder %s6, 4
      %s13 = sphi 0, %s25
      %s14 = sphi 0, %s21
      %s15 = sphi 0, %s13
      %s16 = sphi 0, %s14
      %s17 = sphi 0, %s15
      %s18 = sphi 0, %s16
    $region4: #{reverse.1} parent=1 // loop_header_branch
      %9 = sbr.rel (%p7) target = $region8
    $region5: #{reverse.1} parent=1 // loop_body
      %s11 = ssub.s32 %s6, 1
      %s12 = ssub.s32 %s6, 2
      %s19 = sadd.s32 1, %s14
      %p20 = scmp.ge.s32.totalorder %s19, 2
      %s21 = scalar_select %p20, 0, %s19
      %s22 = sadd.s32 1, %s13
      %s23 = scalar_select %p20, %s22, %s13
      %p24 = scmp.ge.s32.totalorder %s23, 1
      %s25 = scalar_select %p24, 0, %s23
      %p26 = scmp.le.s32.totalorder 1, %s6
      %p27 = scmp.lt.s32.totalorder %s6, 3
      %p28 = pnand %p26, %p27
      %p29 = pneg %p28
      // Predicated region
      $region9: #{reverse.1} parent=5 // pred_check
        _
      $region10: #{reverse.1} parent=5 // pred_check_branch
        %31 = sbr.rel (%p28) target = $region12
      $region11: #{reverse.1} parent=5 // pred_region
        %s32 = ssub.s32 %s6, 1
      $region12: #{reverse.1} parent=5 // pred_fallthru
        _
      %p33 = scmp.lt.s32.totalorder %s6, 2
      // Predicated region
      $region13: #{reverse.1} parent=5 // pred_check
        %p34 = pneg %p33
      $region14: #{reverse.1} parent=5 // pred_check_branch
        %36 = sbr.rel (%p34) target = $region16
      $region15: #{reverse.1} parent=5 // pred_region
        %s37 = sand.u32 %s6, 1
        %s38 = sand.u32 %s6, 1
        %s39 = smul.addr %s38, 2
        %s40 = scalar_lea.vmem [#allocation1], %s39
        %s41 = ssub.s32 1, %s14
        %s42 = smul.addr %s13, 2
        %s43 = sadd.s32 %s41, %s42
        %s44 = smul.addr %s43, 2
        %s45 = scalar_lea.vmem %s0, %s44
        // Predicated region
        $region17: #{reverse.1} parent=15 // pred_check
          _
        $region18: #{reverse.1} parent=15 // pred_check_branch
          %47 = sbr.rel (0) target = $region20
        $region19: #{reverse.1} parent=15 // pred_region
          // Predicated region
          $region21: #{reverse.1} parent=19 // pred_check
            _
          $region22: #{reverse.1} parent=19 // pred_check_branch
            %49 = sbr.rel target = $region24
          $region23: #{reverse.1} parent=19 // pred_region
            // Predicated region
            $region36: #{reverse.1} parent=23 // pred_check
              _
            $region37: #{reverse.1} parent=23 // pred_check_branch
              %64 = sbr.rel (0) target = $region39
            $region38: #{reverse.1} parent=23 // pred_region
              loop: start=0, step=1, limit=1
              $region40: #{reverse.1} parent=38 // loop_pre_header
                _
              $region41: #{reverse.1} parent=38 // loop_header
                %s67 = sphi 0, %s71
                %p68 = scmp.ge.s32.totalorder %s67, 1
                %s72 = sphi %s45, %s45
                %s73 = sphi %s40, %s40
              $region42: #{reverse.1} parent=38 // loop_header_branch
                %70 = sbr.rel (%p68) target = $region46
              $region43: #{reverse.1} parent=38 // loop_body
                %v74 = vld [vmem:[%s72] sm:$0x3]
                %75 = vst [vmem:[%s73] sm:$0x3] %v74
              $region44: #{reverse.1} parent=38 // loop_footer
                %s71 = sadd.s32 1, %s67
              $region45: #{reverse.1} parent=38 // loop_footer_branch
                %66 = sbr.rel target = $region41
              $region46: #{reverse.1} parent=38 // loop_exit
                _
            $region39: #{reverse.1} parent=23 // pred_fallthru
              _
          $region24: #{reverse.1} parent=19 // pred_fallthru
            _
          // Predicated region
          $region25: #{reverse.1} parent=19 // pred_check
            _
          $region26: #{reverse.1} parent=19 // pred_check_branch
            %51 = sbr.rel (0) target = $region28
          $region27: #{reverse.1} parent=19 // pred_region
            loop: start=0, step=1, limit=1
            $region29: #{reverse.1} parent=27 // loop_pre_header
              _
            $region30: #{reverse.1} parent=27 // loop_header
              %s54 = sphi 0, %s58
              %p55 = scmp.ge.s32.totalorder %s54, 1
              %s59 = sphi %s45, %s45
              %s60 = sphi %s40, %s40
            $region31: #{reverse.1} parent=27 // loop_header_branch
              %57 = sbr.rel (%p55) target = $region35
            $region32: #{reverse.1} parent=27 // loop_body
              %v61 = vld [vmem:[%s59] sm:$0x3]
              %62 = vst [vmem:[%s60] sm:$0x3] %v61
            $region33: #{reverse.1} parent=27 // loop_footer
              %s58 = sadd.s32 1, %s54
            $region34: #{reverse.1} parent=27 // loop_footer_branch
              %53 = sbr.rel target = $region30
            $region35: #{reverse.1} parent=27 // loop_exit
              _
          $region28: #{reverse.1} parent=19 // pred_fallthru
            _
        $region20: #{reverse.1} parent=15 // pred_fallthru
          _
        %76 = vnop
      $region16: #{reverse.1} parent=5 // pred_fallthru
        _
      %p77 = scmp.le.s32.totalorder 1, %s6
      %p78 = scmp.lt.s32.totalorder %s6, 3
      %p79 = pnand %p77, %p78
      %p80 = pneg %p79
      // Predicated region
      $region47: #{reverse.1} parent=5 // pred_check
        _
      $region48: #{reverse.1} parent=5 // pred_check_branch
        %82 = sbr.rel (%p79) target = $region50
      $region49: #{reverse.1} parent=5 // pred_region
        %s83 = ssub.s32 %s6, 1
        %s84 = sand.u32 %s11, 1
        %s85 = sand.u32 %s11, 1
        %s86 = smul.addr %s85, 2
        %s87 = scalar_lea.vmem [#allocation1], %s86
        %s88 = sand.u32 %s11, 1
        %s89 = sand.u32 %s11, 1
        %s90 = smul.addr %s89, 2
        %s91 = scalar_lea.vmem [#allocation1], %s90
        %s92 = sand.u32 %s11, 1
        %s93 = sand.u32 %s11, 1
        %s94 = smul.addr %s93, 2
        %s95 = scalar_lea.vmem [#allocation3], %s94
        %s97 = sshllo.u32 0, 2
        %v98 = vld [vmem:[%s91] sm:%s97]
        %99 = vst [vmem:[#allocation0] sm:%s97] %v98
        %s100 = ssub.s32 1, %s16
        %v101 = vld [vmem:[#allocation0] sm:$0xff]
        %102 = vperm.xlu0 %4, %v101
        %v103 = vpop.permute.xlu0 %102
        %104 = vst [vmem:[#allocation2] sm:$0xff] %v103
        %s106 = sshllo.u32 0, 2
        %v108 = vld [vmem:[#allocation2] sm:%s106]
        %s109 = sshllo.u32 0, 2
        %110 = vst [vmem:[%s95] sm:%s109] %v108
        %s111 = sand.u32 %s11, 1
        %s112 = sand.u32 %s11, 1
        %s113 = smul.addr %s112, 2
        %s114 = scalar_lea.vmem [#allocation3], %s113
        %s115 = smul.addr %s15, 2
        %s116 = sadd.s32 %s16, %s115
        %s117 = smul.addr %s116, 2
        %s118 = scalar_lea.vmem %s1, %s117
        // Predicated region
        $region51: #{reverse.1} parent=49 // pred_check
          _
        $region52: #{reverse.1} parent=49 // pred_check_branch
          %120 = sbr.rel (0) target = $region54
        $region53: #{reverse.1} parent=49 // pred_region
          // Predicated region
          $region55: #{reverse.1} parent=53 // pred_check
            _
          $region56: #{reverse.1} parent=53 // pred_check_branch
            %122 = sbr.rel target = $region58
          $region57: #{reverse.1} parent=53 // pred_region
            // Predicated region
            $region70: #{reverse.1} parent=57 // pred_check
              _
            $region71: #{reverse.1} parent=57 // pred_check_branch
              %137 = sbr.rel (0) target = $region73
            $region72: #{reverse.1} parent=57 // pred_region
              loop: start=0, step=1, limit=1
              $region74: #{reverse.1} parent=72 // loop_pre_header
                _
              $region75: #{reverse.1} parent=72 // loop_header
                %s140 = sphi 0, %s144
                %p141 = scmp.ge.s32.totalorder %s140, 1
                %s145 = sphi %s114, %s114
                %s146 = sphi %s118, %s118
              $region76: #{reverse.1} parent=72 // loop_header_branch
                %143 = sbr.rel (%p141) target = $region80
              $region77: #{reverse.1} parent=72 // loop_body
                %v147 = vld [vmem:[%s145] sm:$0x3]
                %148 = vst [vmem:[%s146] sm:$0x3] %v147
              $region78: #{reverse.1} parent=72 // loop_footer
                %s144 = sadd.s32 1, %s140
              $region79: #{reverse.1} parent=72 // loop_footer_branch
                %139 = sbr.rel target = $region75
              $region80: #{reverse.1} parent=72 // loop_exit
                _
            $region73: #{reverse.1} parent=57 // pred_fallthru
              _
          $region58: #{reverse.1} parent=53 // pred_fallthru
            _
          // Predicated region
          $region59: #{reverse.1} parent=53 // pred_check
            _
          $region60: #{reverse.1} parent=53 // pred_check_branch
            %124 = sbr.rel (0) target = $region62
          $region61: #{reverse.1} parent=53 // pred_region
            loop: start=0, step=1, limit=1
            $region63: #{reverse.1} parent=61 // loop_pre_header
              _
            $region64: #{reverse.1} parent=61 // loop_header
              %s127 = sphi 0, %s131
              %p128 = scmp.ge.s32.totalorder %s127, 1
              %s132 = sphi %s114, %s114
              %s133 = sphi %s118, %s118
            $region65: #{reverse.1} parent=61 // loop_header_branch
              %130 = sbr.rel (%p128) target = $region69
            $region66: #{reverse.1} parent=61 // loop_body
              %v134 = vld [vmem:[%s132] sm:$0x3]
              %135 = vst [vmem:[%s133] sm:$0x3] %v134
            $region67: #{reverse.1} parent=61 // loop_footer
              %s131 = sadd.s32 1, %s127
            $region68: #{reverse.1} parent=61 // loop_footer_branch
              %126 = sbr.rel target = $region64
            $region69: #{reverse.1} parent=61 // loop_exit
              _
          $region62: #{reverse.1} parent=53 // pred_fallthru
            _
        $region54: #{reverse.1} parent=49 // pred_fallthru
          _
        %149 = vnop
      $region50: #{reverse.1} parent=5 // pred_fallthru
        _
      %p150 = scmp.le.s32.totalorder 2, %s6
      // Predicated region
      $region81: #{reverse.1} parent=5 // pred_check
        %p151 = pneg %p150
      $region82: #{reverse.1} parent=5 // pred_check_branch
        %153 = sbr.rel (%p151) target = $region84
      $region83: #{reverse.1} parent=5 // pred_region
        %s154 = ssub.s32 %s6, 2
        %s155 = sand.u32 %s12, 1
        %s156 = sand.u32 %s12, 1
        %s157 = smul.addr %s156, 2
        %s158 = scalar_lea.vmem [#allocation3], %s157
      $region84: #{reverse.1} parent=5 // pred_fallthru
        _
    $region6: #{reverse.1} parent=1 // loop_footer
      %s10 = sadd.s32 1, %s6
    $region7: #{reverse.1} parent=1 // loop_footer_branch
      %5 = sbr.rel target = $region3
    $region8: #{reverse.1} parent=1 // loop_exit
      _

// kernel: mfcc_specaug_forward.3
$region0: #{mfcc_specaug_forward.3}
  #allocation0 [shape = 'u32[]', space=smem, size = 0x4, offset = 0x4, fixed_abs, tag = 'smem constant byte address 0x4 - core index']
  #allocation1 [shape = 'u32[144,128]{1,0:T(1,128)}', space=vmem, size = 0x12000, scoped, tag = 'internal scratch']
  #allocation2 [shape = 'f32[1]{0:T(128)S(6)}', space=smem, size = 0x200, scoped, tag = 'scoped memory for mfcc_specaug_forward.3']
  %s0 = inlined_call_operand.<no memory space> [shape: f32[1], index: 0, kind: input, shape index: {}]
  %s1 = inlined_call_operand.vmem [shape: f32[24,128], index: 1, kind: input, shape index: {}]
  %s2 = inlined_call_operand.vmem [shape: f32[128,128], index: 2, kind: input, shape index: {}]
  %s3 = inlined_call_operand.vmem [shape: f32[24,128], index: 3, kind: output, shape index: {}]
  %s4 = sld [smem:[#allocation0]]
  $region22: #{mfcc_specaug_forward.3} parent=0
    _
  %s6 = ssub.s32 1, %s4
  %s7 = scalar_select 0, %s6, %s4
  %8 = sst [smem:[#allocation2]] %s0
  // Predicated region
  $region2: #{mfcc_specaug_forward.3} parent=0 // pred_check
    _
  $region3: #{mfcc_specaug_forward.3} parent=0 // pred_check_branch
    %10 = sbr.rel (0) target = $region5
  $region4: #{mfcc_specaug_forward.3} parent=0 // pred_region
    _
  $region5: #{mfcc_specaug_forward.3} parent=0 // pred_fallthru
    _
  // Predicated region
  $region6: #{mfcc_specaug_forward.3} parent=0 // pred_check
    _
  $region7: #{mfcc_specaug_forward.3} parent=0 // pred_check_branch
    %12 = sbr.rel (0) target = $region9
  $region8: #{mfcc_specaug_forward.3} parent=0 // pred_region
    _
  $region9: #{mfcc_specaug_forward.3} parent=0 // pred_fallthru
    _
  // Predicated region
  $region10: #{mfcc_specaug_forward.3} parent=0 // pred_check
    _
  $region11: #{mfcc_specaug_forward.3} parent=0 // pred_check_branch
    %14 = sbr.rel (0) target = $region13
  $region12: #{mfcc_specaug_forward.3} parent=0 // pred_region
    _
  $region13: #{mfcc_specaug_forward.3} parent=0 // pred_fallthru
    _
  %s15 = sld [smem:[#allocation2]]
  %s16 = ssub.f32 %s15, 80.0
  %v17 = vld [vmem:[%s1] sm:$0xff]
  %v18 = vld [vmem:[%s1 + $0x8] sm:$0xff]
  %v19 = vld [vmem:[%s1 + $0x10] sm:$0xff]
  %v20 = vstv %s16
  %v21 = vmax.f32 %v17, %v20
  %v22 = vmax.f32 %v18, %v20
  %v23 = vmax.f32 %v19, %v20
  %v24 = vld [vmem:[%s2] sm:$0xff]
  %v25 = vld [vmem:[%s2 + $0x8] sm:$0xff]
  %v26 = vld [vmem:[%s2 + $0x10] sm:$0xff]
  %v27 = vld [vmem:[%s2 + $0x18] sm:$0xff]
  %v28 = vld [vmem:[%s2 + $0x20] sm:$0xff]
  %v29 = vld [vmem:[%s2 + $0x28] sm:$0xff]
  %v30 = vld [vmem:[%s2 + $0x30] sm:$0xff]
  %v31 = vld [vmem:[%s2 + $0x38] sm:$0xff]
  %v32 = vld [vmem:[%s2 + $0x40] sm:$0xff]
  %v33 = vld [vmem:[%s2 + $0x48] sm:$0xff]
  %v34 = vld [vmem:[%s2 + $0x50] sm:$0xff]
  %v35 = vld [vmem:[%s2 + $0x58] sm:$0xff]
  %v36 = vld [vmem:[%s2 + $0x60] sm:$0xff]
  %v37 = vld [vmem:[%s2 + $0x68] sm:$0xff]
  %v38 = vld [vmem:[%s2 + $0x70] sm:$0xff]
  %v39 = vld [vmem:[%s2 + $0x78] sm:$0xff]
  %40 = vmatprep.subr.mxu0 0.0
  %41 = vmatpush1.msra.mxu0 %v24
  %42 = vmatprep.subr.mxu0 0.0
  %43 = vmatpush1.msra.mxu0 %v25
  %44 = vmatprep.subr.mxu0 0.0
  %45 = vmatpush1.msra.mxu0 %v26
  %46 = vmatprep.subr.mxu0 0.0
  %47 = vmatpush1.msra.mxu0 %v27
  %48 = vmatprep.subr.mxu0 0.0
  %49 = vmatpush1.msra.mxu0 %v28
  %50 = vmatprep.subr.mxu0 0.0
  %51 = vmatpush1.msra.mxu0 %v29
  %52 = vmatprep.subr.mxu0 0.0
  %53 = vmatpush1.msra.mxu0 %v30
  %54 = vmatprep.subr.mxu0 0.0
  %55 = vmatpush1.msra.mxu0 %v31
  %56 = vmatprep.subr.mxu0 0.0
  %57 = vmatpush1.msra.mxu0 %v32
  %58 = vmatprep.subr.mxu0 0.0
  %59 = vmatpush1.msra.mxu0 %v33
  %60 = vmatprep.subr.mxu0 0.0
  %61 = vmatpush1.msra.mxu0 %v34
  %62 = vmatprep.subr.mxu0 0.0
  %63 = vmatpush1.msra.mxu0 %v35
  %64 = vmatprep.subr.mxu0 0.0
  %65 = vmatpush1.msra.mxu0 %v36
  %66 = vmatprep.subr.mxu0 0.0
  %67 = vmatpush1.msra.mxu0 %v37
  %68 = vmatprep.subr.mxu0 0.0
  %69 = vmatpush1.msra.mxu0 %v38
  %70 = vmatprep.subr.mxu0 0.0
  %71 = vmatpush1.msra.mxu0 %v39
  %72 = vmatprep.subr.mxu0 0.0
  %73 = vmatpush1.msra.mxu0 0.0
  %74 = vmatprep.subr.mxu0 0.0
  %75 = vmatpush1.msra.mxu0 0.0
  %76 = vmatprep.subr.mxu0 0.0
  %77 = vmatpush1.msra.mxu0 0.0
  %78 = vmatprep.subr.mxu0 0.0
  %79 = vmatpush1.msra.mxu0 0.0
  %80 = vmatprep.subr.mxu0 0.0
  %81 = vmatpush1.msra.mxu0 0.0
  %82 = vmatprep.subr.mxu0 0.0
  %83 = vmatpush1.msra.mxu0 0.0
  %84 = vmatprep.subr.mxu0 0.0
  %85 = vmatpush1.msra.mxu0 0.0
  %86 = vmatprep.subr.mxu0 0.0
  %87 = vmatpush1.msra.mxu0 0.0
  %88 = vmatprep.subr.mxu0 0.0
  %89 = vmatpush1.msra.mxu0 0.0
  %90 = vmatprep.subr.mxu0 0.0
  %91 = vmatpush1.msra.mxu0 0.0
  %92 = vmatprep.subr.mxu0 0.0
  %93 = vmatpush1.msra.mxu0 0.0
  %94 = vmatprep.subr.mxu0 0.0
  %95 = vmatpush1.msra.mxu0 0.0
  %96 = vmatprep.subr.mxu0 0.0
  %97 = vmatpush1.msra.mxu0 0.0
  %98 = vmatprep.subr.mxu0 0.0
  %99 = vmatpush1.msra.mxu0 0.0
  %100 = vmatprep.subr.mxu0 0.0
  %101 = vmatpush1.msra.mxu0 0.0
  %102 = vmatprep.subr.mxu0 0.0
  %103 = vmatpush1.msra.mxu0 0.0
  %104 = vmatprep.mubr.f32.mxu0 0.0
  %105 = vmatmul.mubr.f32.gmra.mrb[0].mxu0 %v21
  %v106 = vpop.f32.mrb[0].mxu0
  %v107 = vadd.f32 0.0, %v106
  %v108 = vpop.f32.mrb[0].mxu0
  %109 = vmatprep.mubr.f32.mxu0 0.0
  %110 = vmatmul.mubr.f32.gmra.mrb[0].mxu0 %v22
  %v111 = vpop.f32.mrb[0].mxu0
  %v112 = vadd.f32 0.0, %v111
  %v113 = vpop.f32.mrb[0].mxu0
  %114 = vmatprep.mubr.f32.mxu0 0.0
  %115 = vmatmul.mubr.f32.gmra.mrb[0].mxu0 %v23
  %v116 = vpop.f32.mrb[0].mxu0
  %v117 = vadd.f32 0.0, %v116
  %v118 = vpop.f32.mrb[0].mxu0
  %119 = vdwg.mxu0
  %120 = vst [vmem:[%s3] sm:$0xff] %v107
  %121 = vst [vmem:[%s3 + $0x8] sm:$0xff] %v112
  %122 = vst [vmem:[%s3 + $0x10] sm:$0xff] %v117
  // Predicated region
  $region14: #{mfcc_specaug_forward.3} parent=0 // pred_check
    _
  $region15: #{mfcc_specaug_forward.3} parent=0 // pred_check_branch
    %124 = sbr.rel (0) target = $region17
  $region16: #{mfcc_specaug_forward.3} parent=0 // pred_region
    _
  $region17: #{mfcc_specaug_forward.3} parent=0 // pred_fallthru
    _
  // Predicated region
  $region18: #{mfcc_specaug_forward.3} parent=0 // pred_check
    _
  $region19: #{mfcc_specaug_forward.3} parent=0 // pred_check_branch
    %126 = sbr.rel (0) target = $region21
  $region20: #{mfcc_specaug_forward.3} parent=0 // pred_region
    _
  $region21: #{mfcc_specaug_forward.3} parent=0 // pred_fallthru
    _

// kernel: mfcc_specaug_forward.2
$region0: #{mfcc_specaug_forward.2}
  #allocation0 [shape = 'u32[]', space=smem, size = 0x4, offset = 0x4, fixed_abs, tag = 'smem constant byte address 0x4 - core index']
  #allocation1 [shape = 'u32[144,128]{1,0:T(1,128)}', space=vmem, size = 0x12000, scoped, tag = 'internal scratch']
  %s0 = inlined_call_operand.vmem [shape: f32[24,400], index: 0, kind: input, shape index: {}]
  %s1 = inlined_call_operand.hbm [shape: f32[400,512], index: 1, kind: input, shape index: {}]
  %s2 = inlined_call_operand.vmem [shape: f32[256,128], index: 2, kind: input, shape index: {}]
  %s3 = inlined_call_operand.vmem [shape: f32[24,128], index: 3, kind: output, shape index: {0}]
  %s4 = inlined_call_operand.vmem [shape: f32[1,8,128], index: 4, kind: output, shape index: {1}]
  %5 = xla_tuple %s3, %s4
  %s6 = sld [smem:[#allocation0]]
  $region34: #{mfcc_specaug_forward.2} parent=0
    _
  %s8 = ssub.s32 1, %s6
  %s9 = scalar_select 0, %s8, %s6
  $region1: #{mfcc_specaug_forward.2} parent=0
    #allocation2 [shape = 'u8[819200]{0}', space=vmem, size = 0xc8000, scoped, tag = 'input window, operand 1, single buffered']
    #allocation3 [shape = 's32[1]{0}', space=sflag, size = 0x4, scoped, tag = 'scoped memory for mfcc_specaug_forward.2']
    %10 = vsyncpa [#allocation3], 0
    // Predicated region
    $region2: #{mfcc_specaug_forward.2} parent=1 // pred_check
      _
    $region3: #{mfcc_specaug_forward.2} parent=1 // pred_check_branch
      %12 = sbr.rel (0) target = $region5
    $region4: #{mfcc_specaug_forward.2} parent=1 // pred_region
      _
    $region5: #{mfcc_specaug_forward.2} parent=1 // pred_fallthru
      _
    // Predicated region
    $region6: #{mfcc_specaug_forward.2} parent=1 // pred_check
      _
    $region7: #{mfcc_specaug_forward.2} parent=1 // pred_check_branch
      %14 = sbr.rel (0) target = $region9
    $region8: #{mfcc_specaug_forward.2} parent=1 // pred_region
      %s16 = ssub.s32 25600, 25600
      %17 = vsyncadd [#allocation3], %s16
      %s18 = sshll.u32 [#allocation2], 4
      %s19 = int_to_ptr.vmem [resolvable:$true] %s18
      %24 = dma.hbm_to_vmem [thread:$0]  %s1, 25600, %s19, [#allocation3], 512, 512, 32
    $region9: #{mfcc_specaug_forward.2} parent=1 // pred_fallthru
      _
    // Predicated region
    $region10: #{mfcc_specaug_forward.2} parent=1 // pred_check
      _
    $region11: #{mfcc_specaug_forward.2} parent=1 // pred_check_branch
      %26 = sbr.rel (0) target = $region13
    $region12: #{mfcc_specaug_forward.2} parent=1 // pred_region
      _
    $region13: #{mfcc_specaug_forward.2} parent=1 // pred_fallthru
      _
    // Predicated region
    $region14: #{mfcc_specaug_forward.2} parent=1 // pred_check
      _
    $region15: #{mfcc_specaug_forward.2} parent=1 // pred_check_branch
      %28 = sbr.rel (0) target = $region17
    $region16: #{mfcc_specaug_forward.2} parent=1 // pred_region
      %29 = dma.done [#allocation3], 25600
    $region17: #{mfcc_specaug_forward.2} parent=1 // pred_fallthru
      _
    %v30 = vld [vmem:[%s0] sm:$0xff]
    %v31 = vld [vmem:[%s0 + $0x8] sm:$0xff]
    %v32 = vld [vmem:[%s0 + $0x10] sm:$0xff]
    %v33 = vld [vmem:[%s0 + $0x18] sm:$0xff]
    %v34 = vld [vmem:[%s0 + $0x20] sm:$0xff]
    %v35 = vld [vmem:[%s0 + $0x28] sm:$0xff]
    %v36 = vld [vmem:[%s0 + $0x30] sm:$0xff]
    %v37 = vld [vmem:[%s0 + $0x38] sm:$0xff]
    %v38 = vld [vmem:[%s0 + $0x40] sm:$0xff]
    %v39 = vld [vmem:[%s0 + $0x48] sm:$0xff]
    %v40 = vld [vmem:[%s0 + $0x50] sm:$0xff]
    %v41 = vld [vmem:[%s0 + $0x58] sm:$0xff]
    %v42 = vld [vmem:[#allocation2] sm:$0xff]
    %v43 = vld [vmem:[#allocation2 + $0x8] sm:$0xff]
    %v44 = vld [vmem:[#allocation2 + $0x10] sm:$0xff]
    %v45 = vld [vmem:[#allocation2 + $0x18] sm:$0xff]
    %v46 = vld [vmem:[#allocation2 + $0x20] sm:$0xff]
    %v47 = vld [vmem:[#allocation2 + $0x28] sm:$0xff]
    %v48 = vld [vmem:[#allocation2 + $0x30] sm:$0xff]
    %v49 = vld [vmem:[#allocation2 + $0x38] sm:$0xff]
    %v50 = vld [vmem:[#allocation2 + $0x40] sm:$0xff]
    %v51 = vld [vmem:[#allocation2 + $0x48] sm:$0xff]
    %v52 = vld [vmem:[#allocation2 + $0x50] sm:$0xff]
    %v53 = vld [vmem:[#allocation2 + $0x58] sm:$0xff]
    %v54 = vld [vmem:[#allocation2 + $0x60] sm:$0xff]
    %v55 = vld [vmem:[#allocation2 + $0x68] sm:$0xff]
    %v56 = vld [vmem:[#allocation2 + $0x70] sm:$0xff]
    %v57 = vld [vmem:[#allocation2 + $0x78] sm:$0xff]
    %v58 = vld [vmem:[#allocation2 + $0x80] sm:$0xff]
    %v59 = vld [vmem:[#allocation2 + $0x88] sm:$0xff]
    %v60 = vld [vmem:[#allocation2 + $0x90] sm:$0xff]
    %v61 = vld [vmem:[#allocation2 + $0x98] sm:$0xff]
    %v62 = vld [vmem:[#allocation2 + $0xa0] sm:$0xff]
    %v63 = vld [vmem:[#allocation2 + $0xa8] sm:$0xff]
    %v64 = vld [vmem:[#allocation2 + $0xb0] sm:$0xff]
    %v65 = vld [vmem:[#allocation2 + $0xb8] sm:$0xff]
    %v66 = vld [vmem:[#allocation2 + $0xc0] sm:$0xff]
    %v67 = vld [vmem:[#allocation2 + $0xc8] sm:$0xff]
    %v68 = vld [vmem:[#allocation2 + $0xd0] sm:$0xff]
    %v69 = vld [vmem:[#allocation2 + $0xd8] sm:$0xff]
    %v70 = vld [vmem:[#allocation2 + $0xe0] sm:$0xff]
    %v71 = vld [vmem:[#allocation2 + $0xe8] sm:$0xff]
    %v72 = vld [vmem:[#allocation2 + $0xf0] sm:$0xff]
    %v73 = vld [vmem:[#allocation2 + $0xf8] sm:$0xff]
    %v74 = vld [vmem:[#allocation2 + $0x100] sm:$0xff]
    %v75 = vld [vmem:[#allocation2 + $0x108] sm:$0xff]
    %v76 = vld [vmem:[#allocation2 + $0x110] sm:$0xff]
    %v77 = vld [vmem:[#allocation2 + $0x118] sm:$0xff]
    %v78 = vld [vmem:[#allocation2 + $0x120] sm:$0xff]
    %v79 = vld [vmem:[#allocation2 + $0x128] sm:$0xff]
    %v80 = vld [vmem:[#allocation2 + $0x130] sm:$0xff]
    %v81 = vld [vmem:[#allocation2 + $0x138] sm:$0xff]
    %v82 = vld [vmem:[#allocation2 + $0x140] sm:$0xff]
    %v83 = vld [vmem:[#allocation2 + $0x148] sm:$0xff]
    %v84 = vld [vmem:[#allocation2 + $0x150] sm:$0xff]
    %v85 = vld [vmem:[#allocation2 + $0x158] sm:$0xff]
    %v86 = vld [vmem:[#allocation2 + $0x160] sm:$0xff]
    %v87 = vld [vmem:[#allocation2 + $0x168] sm:$0xff]
    %v88 = vld [vmem:[#allocation2 + $0x170] sm:$0xff]
    %v89 = vld [vmem:[#allocation2 + $0x178] sm:$0xff]
    %v90 = vld [vmem:[#allocation2 + $0x180] sm:$0xff]
    %v91 = vld [vmem:[#allocation2 + $0x188] sm:$0xff]
    %v92 = vld [vmem:[#allocation2 + $0x190] sm:$0xff]
    %v93 = vld [vmem:[#allocation2 + $0x198] sm:$0xff]
    %v94 = vld [vmem:[#allocation2 + $0x1a0] sm:$0xff]
    %v95 = vld [vmem:[#allocation2 + $0x1a8] sm:$0xff]
    %v96 = vld [vmem:[#allocation2 + $0x1b0] sm:$0xff]
    %v97 = vld [vmem:[#allocation2 + $0x1b8] sm:$0xff]
    %v98 = vld [vmem:[#allocation2 + $0x1c0] sm:$0xff]
    %v99 = vld [vmem:[#allocation2 + $0x1c8] sm:$0xff]
    %v100 = vld [vmem:[#allocation2 + $0x1d0] sm:$0xff]
    %v101 = vld [vmem:[#allocation2 + $0x1d8] sm:$0xff]
    %v102 = vld [vmem:[#allocation2 + $0x1e0] sm:$0xff]
    %v103 = vld [vmem:[#allocation2 + $0x1e8] sm:$0xff]
    %v104 = vld [vmem:[#allocation2 + $0x1f0] sm:$0xff]
    %v105 = vld [vmem:[#allocation2 + $0x1f8] sm:$0xff]
    %v106 = vld [vmem:[#allocation2 + $0x200] sm:$0xff]
    %v107 = vld [vmem:[#allocation2 + $0x208] sm:$0xff]
    %v108 = vld [vmem:[#allocation2 + $0x210] sm:$0xff]
    %v109 = vld [vmem:[#allocation2 + $0x218] sm:$0xff]
    %v110 = vld [vmem:[#allocation2 + $0x220] sm:$0xff]
    %v111 = vld [vmem:[#allocation2 + $0x228] sm:$0xff]
    %v112 = vld [vmem:[#allocation2 + $0x230] sm:$0xff]
    %v113 = vld [vmem:[#allocation2 + $0x238] sm:$0xff]
    %v114 = vld [vmem:[#allocation2 + $0x240] sm:$0xff]
    %v115 = vld [vmem:[#allocation2 + $0x248] sm:$0xff]
    %v116 = vld [vmem:[#allocation2 + $0x250] sm:$0xff]
    %v117 = vld [vmem:[#allocation2 + $0x258] sm:$0xff]
    %v118 = vld [vmem:[#allocation2 + $0x260] sm:$0xff]
    %v119 = vld [vmem:[#allocation2 + $0x268] sm:$0xff]
    %v120 = vld [vmem:[#allocation2 + $0x270] sm:$0xff]
    %v121 = vld [vmem:[#allocation2 + $0x278] sm:$0xff]
    %v122 = vld [vmem:[#allocation2 + $0x280] sm:$0xff]
    %v123 = vld [vmem:[#allocation2 + $0x288] sm:$0xff]
    %v124 = vld [vmem:[#allocation2 + $0x290] sm:$0xff]
    %v125 = vld [vmem:[#allocation2 + $0x298] sm:$0xff]
    %v126 = vld [vmem:[#allocation2 + $0x2a0] sm:$0xff]
    %v127 = vld [vmem:[#allocation2 + $0x2a8] sm:$0xff]
    %v128 = vld [vmem:[#allocation2 + $0x2b0] sm:$0xff]
    %v129 = vld [vmem:[#allocation2 + $0x2b8] sm:$0xff]
    %v130 = vld [vmem:[#allocation2 + $0x2c0] sm:$0xff]
    %v131 = vld [vmem:[#allocation2 + $0x2c8] sm:$0xff]
    %v132 = vld [vmem:[#allocation2 + $0x2d0] sm:$0xff]
    %v133 = vld [vmem:[#allocation2 + $0x2d8] sm:$0xff]
    %v134 = vld [vmem:[#allocation2 + $0x2e0] sm:$0xff]
    %v135 = vld [vmem:[#allocation2 + $0x2e8] sm:$0xff]
    %v136 = vld [vmem:[#allocation2 + $0x2f0] sm:$0xff]
    %v137 = vld [vmem:[#allocation2 + $0x2f8] sm:$0xff]
    %v138 = vld [vmem:[#allocation2 + $0x300] sm:$0xff]
    %v139 = vld [vmem:[#allocation2 + $0x308] sm:$0xff]
    %v140 = vld [vmem:[#allocation2 + $0x310] sm:$0xff]
    %v141 = vld [vmem:[#allocation2 + $0x318] sm:$0xff]
    %v142 = vld [vmem:[#allocation2 + $0x320] sm:$0xff]
    %v143 = vld [vmem:[#allocation2 + $0x328] sm:$0xff]
    %v144 = vld [vmem:[#allocation2 + $0x330] sm:$0xff]
    %v145 = vld [vmem:[#allocation2 + $0x338] sm:$0xff]
    %v146 = vld [vmem:[#allocation2 + $0x340] sm:$0xff]
    %v147 = vld [vmem:[#allocation2 + $0x348] sm:$0xff]
    %v148 = vld [vmem:[#allocation2 + $0x350] sm:$0xff]
    %v149 = vld [vmem:[#allocation2 + $0x358] sm:$0xff]
    %v150 = vld [vmem:[#allocation2 + $0x360] sm:$0xff]
    %v151 = vld [vmem:[#allocation2 + $0x368] sm:$0xff]
    %v152 = vld [vmem:[#allocation2 + $0x370] sm:$0xff]
    %v153 = vld [vmem:[#allocation2 + $0x378] sm:$0xff]
    %v154 = vld [vmem:[#allocation2 + $0x380] sm:$0xff]
    %v155 = vld [vmem:[#allocation2 + $0x388] sm:$0xff]
    %v156 = vld [vmem:[#allocation2 + $0x390] sm:$0xff]
    %v157 = vld [vmem:[#allocation2 + $0x398] sm:$0xff]
    %v158 = vld [vmem:[#allocation2 + $0x3a0] sm:$0xff]
    %v159 = vld [vmem:[#allocation2 + $0x3a8] sm:$0xff]
    %v160 = vld [vmem:[#allocation2 + $0x3b0] sm:$0xff]
    %v161 = vld [vmem:[#allocation2 + $0x3b8] sm:$0xff]
    %v162 = vld [vmem:[#allocation2 + $0x3c0] sm:$0xff]
    %v163 = vld [vmem:[#allocation2 + $0x3c8] sm:$0xff]
    %v164 = vld [vmem:[#allocation2 + $0x3d0] sm:$0xff]
    %v165 = vld [vmem:[#allocation2 + $0x3d8] sm:$0xff]
    %v166 = vld [vmem:[#allocation2 + $0x3e0] sm:$0xff]
    %v167 = vld [vmem:[#allocation2 + $0x3e8] sm:$0xff]
    %v168 = vld [vmem:[#allocation2 + $0x3f0] sm:$0xff]
    %v169 = vld [vmem:[#allocation2 + $0x3f8] sm:$0xff]
    %v170 = vld [vmem:[#allocation2 + $0x400] sm:$0xff]
    %v171 = vld [vmem:[#allocation2 + $0x408] sm:$0xff]
    %v172 = vld [vmem:[#allocation2 + $0x410] sm:$0xff]
    %v173 = vld [vmem:[#allocation2 + $0x418] sm:$0xff]
    %v174 = vld [vmem:[#allocation2 + $0x420] sm:$0xff]
    %v175 = vld [vmem:[#allocation2 + $0x428] sm:$0xff]
    %v176 = vld [vmem:[#allocation2 + $0x430] sm:$0xff]
    %v177 = vld [vmem:[#allocation2 + $0x438] sm:$0xff]
    %v178 = vld [vmem:[#allocation2 + $0x440] sm:$0xff]
    %v179 = vld [vmem:[#allocation2 + $0x448] sm:$0xff]
    %v180 = vld [vmem:[#allocation2 + $0x450] sm:$0xff]
    %v181 = vld [vmem:[#allocation2 + $0x458] sm:$0xff]
    %v182 = vld [vmem:[#allocation2 + $0x460] sm:$0xff]
    %v183 = vld [vmem:[#allocation2 + $0x468] sm:$0xff]
    %v184 = vld [vmem:[#allocation2 + $0x470] sm:$0xff]
    %v185 = vld [vmem:[#allocation2 + $0x478] sm:$0xff]
    %v186 = vld [vmem:[#allocation2 + $0x480] sm:$0xff]
    %v187 = vld [vmem:[#allocation2 + $0x488] sm:$0xff]
    %v188 = vld [vmem:[#allocation2 + $0x490] sm:$0xff]
    %v189 = vld [vmem:[#allocation2 + $0x498] sm:$0xff]
    %v190 = vld [vmem:[#allocation2 + $0x4a0] sm:$0xff]
    %v191 = vld [vmem:[#allocation2 + $0x4a8] sm:$0xff]
    %v192 = vld [vmem:[#allocation2 + $0x4b0] sm:$0xff]
    %v193 = vld [vmem:[#allocation2 + $0x4b8] sm:$0xff]
    %v194 = vld [vmem:[#allocation2 + $0x4c0] sm:$0xff]
    %v195 = vld [vmem:[#allocation2 + $0x4c8] sm:$0xff]
    %v196 = vld [vmem:[#allocation2 + $0x4d0] sm:$0xff]
    %v197 = vld [vmem:[#allocation2 + $0x4d8] sm:$0xff]
    %v198 = vld [vmem:[#allocation2 + $0x4e0] sm:$0xff]
    %v199 = vld [vmem:[#allocation2 + $0x4e8] sm:$0xff]
    %v200 = vld [vmem:[#allocation2 + $0x4f0] sm:$0xff]
    %v201 = vld [vmem:[#allocation2 + $0x4f8] sm:$0xff]
    %v202 = vld [vmem:[#allocation2 + $0x500] sm:$0xff]
    %v203 = vld [vmem:[#allocation2 + $0x508] sm:$0xff]
    %v204 = vld [vmem:[#allocation2 + $0x510] sm:$0xff]
    %v205 = vld [vmem:[#allocation2 + $0x518] sm:$0xff]
    %v206 = vld [vmem:[#allocation2 + $0x520] sm:$0xff]
    %v207 = vld [vmem:[#allocation2 + $0x528] sm:$0xff]
    %v208 = vld [vmem:[#allocation2 + $0x530] sm:$0xff]
    %v209 = vld [vmem:[#allocation2 + $0x538] sm:$0xff]
    %v210 = vld [vmem:[#allocation2 + $0x540] sm:$0xff]
    %v211 = vld [vmem:[#allocation2 + $0x548] sm:$0xff]
    %v212 = vld [vmem:[#allocation2 + $0x550] sm:$0xff]
    %v213 = vld [vmem:[#allocation2 + $0x558] sm:$0xff]
    %v214 = vld [vmem:[#allocation2 + $0x560] sm:$0xff]
    %v215 = vld [vmem:[#allocation2 + $0x568] sm:$0xff]
    %v216 = vld [vmem:[#allocation2 + $0x570] sm:$0xff]
    %v217 = vld [vmem:[#allocation2 + $0x578] sm:$0xff]
    %v218 = vld [vmem:[#allocation2 + $0x580] sm:$0xff]
    %v219 = vld [vmem:[#allocation2 + $0x588] sm:$0xff]
    %v220 = vld [vmem:[#allocation2 + $0x590] sm:$0xff]
    %v221 = vld [vmem:[#allocation2 + $0x598] sm:$0xff]
    %v222 = vld [vmem:[#allocation2 + $0x5a0] sm:$0xff]
    %v223 = vld [vmem:[#allocation2 + $0x5a8] sm:$0xff]
    %v224 = vld [vmem:[#allocation2 + $0x5b0] sm:$0xff]
    %v225 = vld [vmem:[#allocation2 + $0x5b8] sm:$0xff]
    %v226 = vld [vmem:[#allocation2 + $0x5c0] sm:$0xff]
    %v227 = vld [vmem:[#allocation2 + $0x5c8] sm:$0xff]
    %v228 = vld [vmem:[#allocation2 + $0x5d0] sm:$0xff]
    %v229 = vld [vmem:[#allocation2 + $0x5d8] sm:$0xff]
    %v230 = vld [vmem:[#allocation2 + $0x5e0] sm:$0xff]
    %v231 = vld [vmem:[#allocation2 + $0x5e8] sm:$0xff]
    %v232 = vld [vmem:[#allocation2 + $0x5f0] sm:$0xff]
    %v233 = vld [vmem:[#allocation2 + $0x5f8] sm:$0xff]
    %v234 = vld [vmem:[#allocation2 + $0x600] sm:$0xff]
    %v235 = vld [vmem:[#allocation2 + $0x608] sm:$0xff]
    %v236 = vld [vmem:[#allocation2 + $0x610] sm:$0xff]
    %v237 = vld [vmem:[#allocation2 + $0x618] sm:$0xff]
    %v238 = vld [vmem:[#allocation2 + $0x620] sm:$0xff]
    %v239 = vld [vmem:[#allocation2 + $0x628] sm:$0xff]
    %v240 = vld [vmem:[#allocation2 + $0x630] sm:$0xff]
    %v241 = vld [vmem:[#allocation2 + $0x638] sm:$0xff]
    %vm242 = vcmask 130048
    %v244 = vsel %vm242, %v33, 0
    %v247 = vsel %vm242, %v37, 0
    %v250 = vsel %vm242, %v41, 0
    %252 = vmatprep.subr.mxu0 %v43
    %253 = vmatpush1.msra.mxu0 %v42
    %254 = vmatprep.subr.mxu0 %v47
    %255 = vmatpush1.msra.mxu0 %v46
    %256 = vmatprep.subr.mxu0 %v51
    %257 = vmatpush1.msra.mxu0 %v50
    %258 = vmatprep.subr.mxu0 %v55
    %259 = vmatpush1.msra.mxu0 %v54
    %260 = vmatprep.subr.mxu0 %v59
    %261 = vmatpush1.msra.mxu0 %v58
    %262 = vmatprep.subr.mxu0 %v63
    %263 = vmatpush1.msra.mxu0 %v62
    %264 = vmatprep.subr.mxu0 %v67
    %265 = vmatpush1.msra.mxu0 %v66
    %266 = vmatprep.subr.mxu0 %v71
    %267 = vmatpush1.msra.mxu0 %v70
    %268 = vmatprep.subr.mxu0 %v75
    %269 = vmatpush1.msra.mxu0 %v74
    %270 = vmatprep.subr.mxu0 %v79
    %271 = vmatpush1.msra.mxu0 %v78
    %272 = vmatprep.subr.mxu0 %v83
    %273 = vmatpush1.msra.mxu0 %v82
    %274 = vmatprep.subr.mxu0 %v87
    %275 = vmatpush1.msra.mxu0 %v86
    %276 = vmatprep.subr.mxu0 %v91
    %277 = vmatpush1.msra.mxu0 %v90
    %278 = vmatprep.subr.mxu0 %v95
    %279 = vmatpush1.msra.mxu0 %v94
    %280 = vmatprep.subr.mxu0 %v99
    %281 = vmatpush1.msra.mxu0 %v98
    %282 = vmatprep.subr.mxu0 %v103
    %283 = vmatpush1.msra.mxu0 %v102
    %284 = vmatprep.subr.mxu0 %v107
    %285 = vmatpush1.msra.mxu0 %v106
    %286 = vmatprep.subr.mxu0 %v111
    %287 = vmatpush1.msra.mxu0 %v110
    %288 = vmatprep.subr.mxu0 %v115
    %289 = vmatpush1.msra.mxu0 %v114
    %290 = vmatprep.subr.mxu0 %v119
    %291 = vmatpush1.msra.mxu0 %v118
    %292 = vmatprep.subr.mxu0 %v123
    %293 = vmatpush1.msra.mxu0 %v122
    %294 = vmatprep.subr.mxu0 %v127
    %295 = vmatpush1.msra.mxu0 %v126
    %296 = vmatprep.subr.mxu0 %v131
    %297 = vmatpush1.msra.mxu0 %v130
    %298 = vmatprep.subr.mxu0 %v135
    %299 = vmatpush1.msra.mxu0 %v134
    %300 = vmatprep.subr.mxu0 %v139
    %301 = vmatpush1.msra.mxu0 %v138
    %302 = vmatprep.subr.mxu0 %v143
    %303 = vmatpush1.msra.mxu0 %v142
    %304 = vmatprep.subr.mxu0 %v147
    %305 = vmatpush1.msra.mxu0 %v146
    %306 = vmatprep.subr.mxu0 %v151
    %307 = vmatpush1.msra.mxu0 %v150
    %308 = vmatprep.subr.mxu0 %v155
    %309 = vmatpush1.msra.mxu0 %v154
    %310 = vmatprep.subr.mxu0 %v159
    %311 = vmatpush1.msra.mxu0 %v158
    %312 = vmatprep.subr.mxu0 %v163
    %313 = vmatpush1.msra.mxu0 %v162
    %314 = vmatprep.subr.mxu0 %v167
    %315 = vmatpush1.msra.mxu0 %v166
    %316 = vmatprep.mubr.f32.mxu0 %v31
    %317 = vmatmul.mubr.f32.gmra.mrb[0].mxu0 %v30
    %v318 = vpop.f32.mrb[0].mxu0
    %v319 = vadd.f32 0.0, %v318
    %v320 = vpop.f32.mrb[0].mxu0
    %v321 = vadd.f32 0.0, %v320
    %322 = vmatprep.mubr.f32.mxu0 %v35
    %323 = vmatmul.mubr.f32.gmra.mrb[0].mxu0 %v34
    %v324 = vpop.f32.mrb[0].mxu0
    %v325 = vadd.f32 0.0, %v324
    %v326 = vpop.f32.mrb[0].mxu0
    %v327 = vadd.f32 0.0, %v326
    %328 = vmatprep.mubr.f32.mxu0 %v39
    %329 = vmatmul.mubr.f32.gmra.mrb[0].mxu0 %v38
    %v330 = vpop.f32.mrb[0].mxu0
    %v331 = vadd.f32 0.0, %v330
    %v332 = vpop.f32.mrb[0].mxu0
    %v333 = vadd.f32 0.0, %v332
    %334 = vdwg.mxu0
    %335 = vmatprep.subr.mxu0 %v171
    %336 = vmatpush1.msra.mxu0 %v170
    %337 = vmatprep.subr.mxu0 %v175
    %338 = vmatpush1.msra.mxu0 %v174
    %339 = vmatprep.subr.mxu0 %v179
    %340 = vmatpush1.msra.mxu0 %v178
    %341 = vmatprep.subr.mxu0 %v183
    %342 = vmatpush1.msra.mxu0 %v182
    %343 = vmatprep.subr.mxu0 %v187
    %344 = vmatpush1.msra.mxu0 %v186
    %345 = vmatprep.subr.mxu0 %v191
    %346 = vmatpush1.msra.mxu0 %v190
    %347 = vmatprep.subr.mxu0 %v195
    %348 = vmatpush1.msra.mxu0 %v194
    %349 = vmatprep.subr.mxu0 %v199
    %350 = vmatpush1.msra.mxu0 %v198
    %351 = vmatprep.subr.mxu0 %v203
    %352 = vmatpush1.msra.mxu0 %v202
    %353 = vmatprep.subr.mxu0 %v207
    %354 = vmatpush1.msra.mxu0 %v206
    %355 = vmatprep.subr.mxu0 %v211
    %356 = vmatpush1.msra.mxu0 %v210
    %357 = vmatprep.subr.mxu0 %v215
    %358 = vmatpush1.msra.mxu0 %v214
    %359 = vmatprep.subr.mxu0 %v219
    %360 = vmatpush1.msra.mxu0 %v218
    %361 = vmatprep.subr.mxu0 %v223
    %362 = vmatpush1.msra.mxu0 %v222
    %363 = vmatprep.subr.mxu0 %v227
    %364 = vmatpush1.msra.mxu0 %v226
    %365 = vmatprep.subr.mxu0 %v231
    %366 = vmatpush1.msra.mxu0 %v230
    %367 = vmatprep.subr.mxu0 %v235
    %368 = vmatpush1.msra.mxu0 %v234
    %369 = vmatprep.subr.mxu0 %v239
    %370 = vmatpush1.msra.mxu0 %v238
    %371 = vmatprep.subr.mxu0 0.0
    %372 = vmatpush1.msra.mxu0 0.0
    %373 = vmatprep.subr.mxu0 0.0
    %374 = vmatpush1.msra.mxu0 0.0
    %375 = vmatprep.subr.mxu0 0.0
    %376 = vmatpush1.msra.mxu0 0.0
    %377 = vmatprep.subr.mxu0 0.0
    %378 = vmatpush1.msra.mxu0 0.0
    %379 = vmatprep.subr.mxu0 0.0
    %380 = vmatpush1.msra.mxu0 0.0
    %381 = vmatprep.subr.mxu0 0.0
    %382 = vmatpush1.msra.mxu0 0.0
    %383 = vmatprep.subr.mxu0 0.0
    %384 = vmatpush1.msra.mxu0 0.0
    %385 = vmatprep.subr.mxu0 0.0
    %386 = vmatpush1.msra.mxu0 0.0
    %387 = vmatprep.subr.mxu0 0.0
    %388 = vmatpush1.msra.mxu0 0.0
    %389 = vmatprep.subr.mxu0 0.0
    %390 = vmatpush1.msra.mxu0 0.0
    %391 = vmatprep.subr.mxu0 0.0
    %392 = vmatpush1.msra.mxu0 0.0
    %393 = vmatprep.subr.mxu0 0.0
    %394 = vmatpush1.msra.mxu0 0.0
    %395 = vmatprep.subr.mxu0 0.0
    %396 = vmatpush1.msra.mxu0 0.0
    %397 = vmatprep.subr.mxu0 0.0
    %398 = vmatpush1.msra.mxu0 0.0
    %399 = vmatprep.mubr.f32.mxu0 %v244
    %400 = vmatmul.mubr.f32.gmra.mrb[0].mxu0 %v32
    %v401 = vpop.f32.mrb[0].mxu0
    %v402 = vadd.f32 %v319, %v401
    %v403 = vpop.f32.mrb[0].mxu0
    %v404 = vadd.f32 %v321, %v403
    %405 = vmatprep.mubr.f32.mxu0 %v247
    %406 = vmatmul.mubr.f32.gmra.mrb[0].mxu0 %v36
    %v407 = vpop.f32.mrb[0].mxu0
    %v408 = vadd.f32 %v325, %v407
    %v409 = vpop.f32.mrb[0].mxu0
    %v410 = vadd.f32 %v327, %v409
    %411 = vmatprep.mubr.f32.mxu0 %v250
    %412 = vmatmul.mubr.f32.gmra.mrb[0].mxu0 %v40
    %v413 = vpop.f32.mrb[0].mxu0
    %v414 = vadd.f32 %v331, %v413
    %v415 = vpop.f32.mrb[0].mxu0
    %v416 = vadd.f32 %v333, %v415
    %417 = vdwg.mxu0
    %418 = vmatprep.subr.mxu0 %v45
    %419 = vmatpush1.msra.mxu0 %v44
    %420 = vmatprep.subr.mxu0 %v49
    %421 = vmatpush1.msra.mxu0 %v48
    %422 = vmatprep.subr.mxu0 %v53
    %423 = vmatpush1.msra.mxu0 %v52
    %424 = vmatprep.subr.mxu0 %v57
    %425 = vmatpush1.msra.mxu0 %v56
    %426 = vmatprep.subr.mxu0 %v61
    %427 = vmatpush1.msra.mxu0 %v60
    %428 = vmatprep.subr.mxu0 %v65
    %429 = vmatpush1.msra.mxu0 %v64
    %430 = vmatprep.subr.mxu0 %v69
    %431 = vmatpush1.msra.mxu0 %v68
    %432 = vmatprep.subr.mxu0 %v73
    %433 = vmatpush1.msra.mxu0 %v72
    %434 = vmatprep.subr.mxu0 %v77
    %435 = vmatpush1.msra.mxu0 %v76
    %436 = vmatprep.subr.mxu0 %v81
    %437 = vmatpush1.msra.mxu0 %v80
    %438 = vmatprep.subr.mxu0 %v85
    %439 = vmatpush1.msra.mxu0 %v84
    %440 = vmatprep.subr.mxu0 %v89
    %441 = vmatpush1.msra.mxu0 %v88
    %442 = vmatprep.subr.mxu0 %v93
    %443 = vmatpush1.msra.mxu0 %v92
    %444 = vmatprep.subr.mxu0 %v97
    %445 = vmatpush1.msra.mxu0 %v96
    %446 = vmatprep.subr.mxu0 %v101
    %447 = vmatpush1.msra.mxu0 %v100
    %448 = vmatprep.subr.mxu0 %v105
    %449 = vmatpush1.msra.mxu0 %v104
    %450 = vmatprep.subr.mxu0 %v109
    %451 = vmatpush1.msra.mxu0 %v108
    %452 = vmatprep.subr.mxu0 %v113
    %453 = vmatpush1.msra.mxu0 %v112
    %454 = vmatprep.subr.mxu0 %v117
    %455 = vmatpush1.msra.mxu0 %v116
    %456 = vmatprep.subr.mxu0 %v121
    %457 = vmatpush1.msra.mxu0 %v120
    %458 = vmatprep.subr.mxu0 %v125
    %459 = vmatpush1.msra.mxu0 %v124
    %460 = vmatprep.subr.mxu0 %v129
    %461 = vmatpush1.msra.mxu0 %v128
    %462 = vmatprep.subr.mxu0 %v133
    %463 = vmatpush1.msra.mxu0 %v132
    %464 = vmatprep.subr.mxu0 %v137
    %465 = vmatpush1.msra.mxu0 %v136
    %466 = vmatprep.subr.mxu0 %v141
    %467 = vmatpush1.msra.mxu0 %v140
    %468 = vmatprep.subr.mxu0 %v145
    %469 = vmatpush1.msra.mxu0 %v144
    %470 = vmatprep.subr.mxu0 %v149
    %471 = vmatpush1.msra.mxu0 %v148
    %472 = vmatprep.subr.mxu0 %v153
    %473 = vmatpush1.msra.mxu0 %v152
    %474 = vmatprep.subr.mxu0 %v157
    %475 = vmatpush1.msra.mxu0 %v156
    %476 = vmatprep.subr.mxu0 %v161
    %477 = vmatpush1.msra.mxu0 %v160
    %478 = vmatprep.subr.mxu0 %v165
    %479 = vmatpush1.msra.mxu0 %v164
    %480 = vmatprep.subr.mxu0 %v169
    %481 = vmatpush1.msra.mxu0 %v168
    %482 = vmatprep.mubr.f32.mxu0 %v31
    %483 = vmatmul.mubr.f32.gmra.mrb[0].mxu0 %v30
    %v484 = vpop.f32.mrb[0].mxu0
    %v485 = vadd.f32 0.0, %v484
    %v486 = vpop.f32.mrb[0].mxu0
    %v487 = vadd.f32 0.0, %v486
    %488 = vmatprep.mubr.f32.mxu0 %v35
    %489 = vmatmul.mubr.f32.gmra.mrb[0].mxu0 %v34
    %v490 = vpop.f32.mrb[0].mxu0
    %v491 = vadd.f32 0.0, %v490
    %v492 = vpop.f32.mrb[0].mxu0
    %v493 = vadd.f32 0.0, %v492
    %494 = vmatprep.mubr.f32.mxu0 %v39
    %495 = vmatmul.mubr.f32.gmra.mrb[0].mxu0 %v38
    %v496 = vpop.f32.mrb[0].mxu0
    %v497 = vadd.f32 0.0, %v496
    %v498 = vpop.f32.mrb[0].mxu0
    %v499 = vadd.f32 0.0, %v498
    %500 = vdwg.mxu0
    %501 = vmatprep.subr.mxu0 %v173
    %502 = vmatpush1.msra.mxu0 %v172
    %503 = vmatprep.subr.mxu0 %v177
    %504 = vmatpush1.msra.mxu0 %v176
    %505 = vmatprep.subr.mxu0 %v181
    %506 = vmatpush1.msra.mxu0 %v180
    %507 = vmatprep.subr.mxu0 %v185
    %508 = vmatpush1.msra.mxu0 %v184
    %509 = vmatprep.subr.mxu0 %v189
    %510 = vmatpush1.msra.mxu0 %v188
    %511 = vmatprep.subr.mxu0 %v193
    %512 = vmatpush1.msra.mxu0 %v192
    %513 = vmatprep.subr.mxu0 %v197
    %514 = vmatpush1.msra.mxu0 %v196
    %515 = vmatprep.subr.mxu0 %v201
    %516 = vmatpush1.msra.mxu0 %v200
    %517 = vmatprep.subr.mxu0 %v205
    %518 = vmatpush1.msra.mxu0 %v204
    %519 = vmatprep.subr.mxu0 %v209
    %520 = vmatpush1.msra.mxu0 %v208
    %521 = vmatprep.subr.mxu0 %v213
    %522 = vmatpush1.msra.mxu0 %v212
    %523 = vmatprep.subr.mxu0 %v217
    %524 = vmatpush1.msra.mxu0 %v216
    %525 = vmatprep.subr.mxu0 %v221
    %526 = vmatpush1.msra.mxu0 %v220
    %527 = vmatprep.subr.mxu0 %v225
    %528 = vmatpush1.msra.mxu0 %v224
    %529 = vmatprep.subr.mxu0 %v229
    %530 = vmatpush1.msra.mxu0 %v228
    %531 = vmatprep.subr.mxu0 %v233
    %532 = vmatpush1.msra.mxu0 %v232
    %533 = vmatprep.subr.mxu0 %v237
    %534 = vmatpush1.msra.mxu0 %v236
    %535 = vmatprep.subr.mxu0 %v241
    %536 = vmatpush1.msra.mxu0 %v240
    %537 = vmatprep.subr.mxu0 0.0
    %538 = vmatpush1.msra.mxu0 0.0
    %539 = vmatprep.subr.mxu0 0.0
    %540 = vmatpush1.msra.mxu0 0.0
    %541 = vmatprep.subr.mxu0 0.0
    %542 = vmatpush1.msra.mxu0 0.0
    %543 = vmatprep.subr.mxu0 0.0
    %544 = vmatpush1.msra.mxu0 0.0
    %545 = vmatprep.subr.mxu0 0.0
    %546 = vmatpush1.msra.mxu0 0.0
    %547 = vmatprep.subr.mxu0 0.0
    %548 = vmatpush1.msra.mxu0 0.0
    %549 = vmatprep.subr.mxu0 0.0
    %550 = vmatpush1.msra.mxu0 0.0
    %551 = vmatprep.subr.mxu0 0.0
    %552 = vmatpush1.msra.mxu0 0.0
    %553 = vmatprep.subr.mxu0 0.0
    %554 = vmatpush1.msra.mxu0 0.0
    %555 = vmatprep.subr.mxu0 0.0
    %556 = vmatpush1.msra.mxu0 0.0
    %557 = vmatprep.subr.mxu0 0.0
    %558 = vmatpush1.msra.mxu0 0.0
    %559 = vmatprep.subr.mxu0 0.0
    %560 = vmatpush1.msra.mxu0 0.0
    %561 = vmatprep.subr.mxu0 0.0
    %562 = vmatpush1.msra.mxu0 0.0
    %563 = vmatprep.subr.mxu0 0.0
    %564 = vmatpush1.msra.mxu0 0.0
    %565 = vmatprep.mubr.f32.mxu0 %v244
    %566 = vmatmul.mubr.f32.gmra.mrb[0].mxu0 %v32
    %v567 = vpop.f32.mrb[0].mxu0
    %v568 = vadd.f32 %v485, %v567
    %v569 = vpop.f32.mrb[0].mxu0
    %v570 = vadd.f32 %v487, %v569
    %571 = vmatprep.mubr.f32.mxu0 %v247
    %572 = vmatmul.mubr.f32.gmra.mrb[0].mxu0 %v36
    %v573 = vpop.f32.mrb[0].mxu0
    %v574 = vadd.f32 %v491, %v573
    %v575 = vpop.f32.mrb[0].mxu0
    %v576 = vadd.f32 %v493, %v575
    %577 = vmatprep.mubr.f32.mxu0 %v250
    %578 = vmatmul.mubr.f32.gmra.mrb[0].mxu0 %v40
    %v579 = vpop.f32.mrb[0].mxu0
    %v580 = vadd.f32 %v497, %v579
    %v581 = vpop.f32.mrb[0].mxu0
    %v582 = vadd.f32 %v499, %v581
    %583 = vdwg.mxu0
    %v584 = vmul.f32 %v402, %v402
    %v585 = vmul.f32 %v404, %v404
    %v586 = vmul.f32 %v408, %v408
    %v587 = vmul.f32 %v410, %v410
    %v588 = vmul.f32 %v414, %v414
    %v589 = vmul.f32 %v416, %v416
    %v590 = vmul.f32 %v568, %v568
    %v591 = vmul.f32 %v570, %v570
    %v592 = vmul.f32 %v574, %v574
    %v593 = vmul.f32 %v576, %v576
    %v594 = vmul.f32 %v580, %v580
    %v595 = vmul.f32 %v582, %v582
    %v596 = vadd.f32 %v584, %v590
    %v597 = vadd.f32 %v585, %v591
    %v598 = vadd.f32 %v586, %v592
    %v599 = vadd.f32 %v587, %v593
    %v600 = vadd.f32 %v588, %v594
    %v601 = vadd.f32 %v589, %v595
    %v602 = vld [vmem:[%s2] sm:$0xff]
    %v603 = vld [vmem:[%s2 + $0x8] sm:$0xff]
    %v604 = vld [vmem:[%s2 + $0x10] sm:$0xff]
    %v605 = vld [vmem:[%s2 + $0x18] sm:$0xff]
    %v606 = vld [vmem:[%s2 + $0x20] sm:$0xff]
    %v607 = vld [vmem:[%s2 + $0x28] sm:$0xff]
    %v608 = vld [vmem:[%s2 + $0x30] sm:$0xff]
    %v609 = vld [vmem:[%s2 + $0x38] sm:$0xff]
    %v610 = vld [vmem:[%s2 + $0x40] sm:$0xff]
    %v611 = vld [vmem:[%s2 + $0x48] sm:$0xff]
    %v612 = vld [vmem:[%s2 + $0x50] sm:$0xff]
    %v613 = vld [vmem:[%s2 + $0x58] sm:$0xff]
    %v614 = vld [vmem:[%s2 + $0x60] sm:$0xff]
    %v615 = vld [vmem:[%s2 + $0x68] sm:$0xff]
    %v616 = vld [vmem:[%s2 + $0x70] sm:$0xff]
    %v617 = vld [vmem:[%s2 + $0x78] sm:$0xff]
    %v618 = vld [vmem:[%s2 + $0x80] sm:$0xff]
    %v619 = vld [vmem:[%s2 + $0x88] sm:$0xff]
    %v620 = vld [vmem:[%s2 + $0x90] sm:$0xff]
    %v621 = vld [vmem:[%s2 + $0x98] sm:$0xff]
    %v622 = vld [vmem:[%s2 + $0xa0] sm:$0xff]
    %v623 = vld [vmem:[%s2 + $0xa8] sm:$0xff]
    %v624 = vld [vmem:[%s2 + $0xb0] sm:$0xff]
    %v625 = vld [vmem:[%s2 + $0xb8] sm:$0xff]
    %v626 = vld [vmem:[%s2 + $0xc0] sm:$0xff]
    %v627 = vld [vmem:[%s2 + $0xc8] sm:$0xff]
    %v628 = vld [vmem:[%s2 + $0xd0] sm:$0xff]
    %v629 = vld [vmem:[%s2 + $0xd8] sm:$0xff]
    %v630 = vld [vmem:[%s2 + $0xe0] sm:$0xff]
    %v631 = vld [vmem:[%s2 + $0xe8] sm:$0xff]
    %v632 = vld [vmem:[%s2 + $0xf0] sm:$0xff]
    %v633 = vld [vmem:[%s2 + $0xf8] sm:$0xff]
    %634 = vmatprep.subr.mxu0 0.0
    %635 = vmatpush1.msra.mxu0 %v602
    %636 = vmatprep.subr.mxu0 0.0
    %637 = vmatpush1.msra.mxu0 %v603
    %638 = vmatprep.subr.mxu0 0.0
    %639 = vmatpush1.msra.mxu0 %v604
    %640 = vmatprep.subr.mxu0 0.0
    %641 = vmatpush1.msra.mxu0 %v605
    %642 = vmatprep.subr.mxu0 0.0
    %643 = vmatpush1.msra.mxu0 %v606
    %644 = vmatprep.subr.mxu0 0.0
    %645 = vmatpush1.msra.mxu0 %v607
    %646 = vmatprep.subr.mxu0 0.0
    %647 = vmatpush1.msra.mxu0 %v608
    %648 = vmatprep.subr.mxu0 0.0
    %649 = vmatpush1.msra.mxu0 %v609
    %650 = vmatprep.subr.mxu0 0.0
    %651 = vmatpush1.msra.mxu0 %v610
    %652 = vmatprep.subr.mxu0 0.0
    %653 = vmatpush1.msra.mxu0 %v611
    %654 = vmatprep.subr.mxu0 0.0
    %655 = vmatpush1.msra.mxu0 %v612
    %656 = vmatprep.subr.mxu0 0.0
    %657 = vmatpush1.msra.mxu0 %v613
    %658 = vmatprep.subr.mxu0 0.0
    %659 = vmatpush1.msra.mxu0 %v614
    %660 = vmatprep.subr.mxu0 0.0
    %661 = vmatpush1.msra.mxu0 %v615
    %662 = vmatprep.subr.mxu0 0.0
    %663 = vmatpush1.msra.mxu0 %v616
    %664 = vmatprep.subr.mxu0 0.0
    %665 = vmatpush1.msra.mxu0 %v617
    %666 = vmatprep.subr.mxu0 0.0
    %667 = vmatpush1.msra.mxu0 %v618
    %668 = vmatprep.subr.mxu0 0.0
    %669 = vmatpush1.msra.mxu0 %v619
    %670 = vmatprep.subr.mxu0 0.0
    %671 = vmatpush1.msra.mxu0 %v620
    %672 = vmatprep.subr.mxu0 0.0
    %673 = vmatpush1.msra.mxu0 %v621
    %674 = vmatprep.subr.mxu0 0.0
    %675 = vmatpush1.msra.mxu0 %v622
    %676 = vmatprep.subr.mxu0 0.0
    %677 = vmatpush1.msra.mxu0 %v623
    %678 = vmatprep.subr.mxu0 0.0
    %679 = vmatpush1.msra.mxu0 %v624
    %680 = vmatprep.subr.mxu0 0.0
    %681 = vmatpush1.msra.mxu0 %v625
    %682 = vmatprep.subr.mxu0 0.0
    %683 = vmatpush1.msra.mxu0 %v626
    %684 = vmatprep.subr.mxu0 0.0
    %685 = vmatpush1.msra.mxu0 %v627
    %686 = vmatprep.subr.mxu0 0.0
    %687 = vmatpush1.msra.mxu0 %v628
    %688 = vmatprep.subr.mxu0 0.0
    %689 = vmatpush1.msra.mxu0 %v629
    %690 = vmatprep.subr.mxu0 0.0
    %691 = vmatpush1.msra.mxu0 %v630
    %692 = vmatprep.subr.mxu0 0.0
    %693 = vmatpush1.msra.mxu0 %v631
    %694 = vmatprep.subr.mxu0 0.0
    %695 = vmatpush1.msra.mxu0 %v632
    %696 = vmatprep.subr.mxu0 0.0
    %697 = vmatpush1.msra.mxu0 %v633
    %698 = vmatprep.mubr.f32.mxu0 %v597
    %699 = vmatmul.mubr.f32.gmra.mrb[0].mxu0 %v596
    %v700 = vpop.f32.mrb[0].mxu0
    %v701 = vadd.f32 0.0, %v700
    %v702 = vpop.f32.mrb[0].mxu0
    %703 = vmatprep.mubr.f32.mxu0 %v599
    %704 = vmatmul.mubr.f32.gmra.mrb[0].mxu0 %v598
    %v705 = vpop.f32.mrb[0].mxu0
    %v706 = vadd.f32 0.0, %v705
    %v707 = vpop.f32.mrb[0].mxu0
    %708 = vmatprep.mubr.f32.mxu0 %v601
    %709 = vmatmul.mubr.f32.gmra.mrb[0].mxu0 %v600
    %v710 = vpop.f32.mrb[0].mxu0
    %v711 = vadd.f32 0.0, %v710
    %v712 = vpop.f32.mrb[0].mxu0
    %713 = vdwg.mxu0
    %v714 = vmax.f32 %v701, 1e-10
    %v715 = vmax.f32 %v706, 1e-10
    %v716 = vmax.f32 %v711, 1e-10
    %v717 = vlog2.pop %v714
    %v718 = vmul.f32 %v717, 0.6931472
    %v719 = vlog2.pop %v715
    %v720 = vmul.f32 %v719, 0.6931472
    %v721 = vlog2.pop %v716
    %v722 = vmul.f32 %v721, 0.6931472
    %v723 = vmul.f32 %v718, 0.4342945
    %v724 = vmul.f32 %v720, 0.4342945
    %v725 = vmul.f32 %v722, 0.4342945
    %v726 = vmul.f32 %v723, 10.0
    %v727 = vmul.f32 %v724, 10.0
    %v728 = vmul.f32 %v725, 10.0
    %729 = vst [vmem:[%s3] sm:$0xff] %v726
    %730 = vst [vmem:[%s3 + $0x8] sm:$0xff] %v727
    %731 = vst [vmem:[%s3 + $0x10] sm:$0xff] %v728
    %v732 = vmax.f32 %v726, %v727
    %v733 = vmax.f32 %v732, %v728
    %v734 = vrot.slane %v733, 4
    %v735 = vmax.f32 %v733, %v734
    %v736 = vrot.slane %v735, 2
    %v737 = vmax.f32 %v735, %v736
    %v738 = vrot.slane %v737, 1
    %v739 = vmax.f32 %v737, %v738
    %740 = vst [vmem:[%s4] sm:$0xff] %v739
    // Predicated region
    $region18: #{mfcc_specaug_forward.2} parent=1 // pred_check
      _
    $region19: #{mfcc_specaug_forward.2} parent=1 // pred_check_branch
      %742 = sbr.rel (0) target = $region21
    $region20: #{mfcc_specaug_forward.2} parent=1 // pred_region
      _
    $region21: #{mfcc_specaug_forward.2} parent=1 // pred_fallthru
      _
    // Predicated region
    $region22: #{mfcc_specaug_forward.2} parent=1 // pred_check
      _
    $region23: #{mfcc_specaug_forward.2} parent=1 // pred_check_branch
      %744 = sbr.rel (0) target = $region25
    $region24: #{mfcc_specaug_forward.2} parent=1 // pred_region
      _
    $region25: #{mfcc_specaug_forward.2} parent=1 // pred_fallthru
      _
    // Predicated region
    $region26: #{mfcc_specaug_forward.2} parent=1 // pred_check
      _
    $region27: #{mfcc_specaug_forward.2} parent=1 // pred_check_branch
      %746 = sbr.rel (0) target = $region29
    $region28: #{mfcc_specaug_forward.2} parent=1 // pred_region
      _
    $region29: #{mfcc_specaug_forward.2} parent=1 // pred_fallthru
      _
    // Predicated region
    $region30: #{mfcc_specaug_forward.2} parent=1 // pred_check
      _
    $region31: #{mfcc_specaug_forward.2} parent=1 // pred_check_branch
      %748 = sbr.rel (0) target = $region33
    $region32: #{mfcc_specaug_forward.2} parent=1 // pred_region
      _
    $region33: #{mfcc_specaug_forward.2} parent=1 // pred_fallthru
      _
    %749 = vsyncpa [#allocation3], 1

</llo_original>
